<compile_context>
chip_gen: v7x
topology: tpu7x:2x2x1
jax: 0.10.0
libtpu: 0.0.40
codegen_flags: <defaults>
</compile_context>

<pallas_src>
import functools
import math

import jax
import jax.numpy as jnp
from jax.experimental import pallas as pl
from jax.experimental.pallas import tpu as pltpu

_MIB = 1024 * 1024


def _chip_info():
    """Return (vmem_capacity_bytes, num_tensorcores) with safe fallbacks."""
    vmem_cap = 128 * _MIB
    num_tc = 0
    try:
        info = pltpu.get_tpu_info()
        vmem_cap = int(getattr(info, "vmem_capacity_bytes", vmem_cap))
        num_tc = int(getattr(info, "num_cores", 0) or 0)
    except Exception:
        pass
    if num_tc <= 0:
        # v7x exposes 64 MiB VMEM per TensorCore and has 2 TCs per chip.
        num_tc = 2 if vmem_cap <= 64 * _MIB else 1
    return vmem_cap, num_tc


# ----------------------------- kernels --------------------------------------


def _rmsnorm_kernel(x_ref, scale_ref, o_ref, *, d):
    # x_ref:     (row_tile, d)  tile of the flattened input
    # scale_ref: (1, d)         full scale vector (resident; same block each step)
    # o_ref:     (row_tile, d)
    x = x_ref[...].astype(jnp.float32)
    scale = scale_ref[...].astype(jnp.float32)

    sumsq = jnp.sum(x * x, axis=-1, keepdims=True)          # (row_tile, 1)
    # x / (||x|| * d^-1/2) == x * rsqrt(sumsq / d); single EUP rsqrt per row.
    inv_rms = jax.lax.rsqrt(sumsq * (1.0 / d))               # (row_tile, 1)

    o_ref[...] = (x * inv_rms * scale).astype(o_ref.dtype)


def _sumsq_kernel(x_ref, invrms_ref, *, d, d_tile):
    # Pass 1 of the d-tiled fallback: accumulate sum(x^2) over the d grid axis
    # into the resident (row_tile, 1) output block; finalize to rsqrt(./d).
    j = pl.program_id(1)
    x = x_ref[...].astype(jnp.float32)
    # Mask columns past the true feature dim (ragged last d block).
    col = jax.lax.broadcasted_iota(jnp.int32, x.shape, 1) + j * d_tile
    x = jnp.where(col < d, x, 0.0)

    @pl.when(j == 0)
    def _():
        invrms_ref[...] = jnp.zeros_like(invrms_ref)

    invrms_ref[...] += jnp.sum(x * x, axis=-1, keepdims=True)

    @pl.when(j == pl.num_programs(1) - 1)
    def _():
        invrms_ref[...] = jax.lax.rsqrt(invrms_ref[...] * (1.0 / d))


def _apply_kernel(x_ref, invrms_ref, scale_ref, o_ref):
    # Pass 2 of the d-tiled fallback: out = x * inv_rms * scale.
    x = x_ref[...].astype(jnp.float32)
    o_ref[...] = (
        x * invrms_ref[...] * scale_ref[...].astype(jnp.float32)
    ).astype(o_ref.dtype)


# ----------------------------- wrapper ---------------------------------------


def rmsnorm(x, scale, *, row_tile=None, d_tile=None, vmem_limit_bytes=None):
    """Pallas RMSNorm over the last axis of `x` with per-feature `scale` (shape (d,))."""
    d = x.shape[-1]
    assert scale.shape == (d,)

    lead_shape = x.shape[:-1]
    rows = math.prod(lead_shape) if lead_shape else 1
    x2 = x.reshape(rows, d)
    scale2 = scale.reshape(1, d)

    dtype_bytes = jnp.dtype(x.dtype).itemsize
    # Sublane packing: 8 rows for 4-byte, 16 for 2-byte, 32 for 1-byte dtypes.
    sublane = max(8, 32 // dtype_bytes)
    rows_rounded = ((rows + sublane - 1) // sublane) * sublane

    vmem_cap, num_tc = _chip_info()
    if vmem_cap <= 64 * _MIB:         # v7x-class: 64 MiB VMEM / ~3.2 TB/s HBM
        budget, vmem_cap_limit = 36 * _MIB, 56 * _MIB
    else:                             # v5e / v6e: 128 MiB VMEM
        budget, vmem_cap_limit = 44 * _MIB, 100 * _MIB

    # Per-row VMEM cost: double-buffered in + out tiles plus f32 temporaries.
    bytes_per_row = d * (4 * dtype_bytes + 2 * 4)

    use_d_tiling = (d_tile is not None) or (budget // max(bytes_per_row, 1) < sublane)

    if not use_d_tiling:
        # ---------------- main path: full d per tile, tile rows only ---------
        if row_tile is None:
            row_tile = max(sublane, budget // bytes_per_row)
        row_tile = max(sublane, min(row_tile, rows_rounded))
        row_tile = (row_tile // sublane) * sublane

        # Keep >= 2 steps per TensorCore (4 on v7x) so both cores get work and
        # prefetch/writeback overlaps, as long as the row count allows it.
        min_steps = 2 * num_tc
        if rows_rounded >= min_steps * sublane:
            split_cap = (rows_rounded // min_steps) // sublane * sublane
            row_tile = min(row_tile, max(sublane, split_cap))

        grid = (pl.cdiv(rows, row_tile),)  # ragged last block handled by Pallas

        if vmem_limit_bytes is None:
            working_set = row_tile * bytes_per_row + 4 * d * 4 + 2 * _MIB
            vmem_limit_bytes = int(min(max(working_set, 32 * _MIB), vmem_cap_limit))

        out = pl.pallas_call(
            functools.partial(_rmsnorm_kernel, d=d),
            out_shape=jax.ShapeDtypeStruct((rows, d), x.dtype),
            grid_spec=pltpu.PrefetchScalarGridSpec(
                num_scalar_prefetch=0,
                grid=grid,
                in_specs=[
                    pl.BlockSpec((row_tile, d), lambda i: (i, 0)),
                    pl.BlockSpec((1, d), lambda i: (0, 0)),
                ],
                out_specs=pl.BlockSpec((row_tile, d), lambda i: (i, 0)),
            ),
            compiler_params=pltpu.CompilerParams(
                dimension_semantics=("parallel",),
                vmem_limit_bytes=vmem_limit_bytes,
            ),
        )(x2, scale2)
        return out.reshape(*lead_shape, d)

    # ---------------- fallback path: tile the feature axis too --------------
    if row_tile is None:
        row_tile = 8 * sublane
    row_tile = max(sublane, min((row_tile // sublane) * sublane, rows_rounded))

    if d_tile is None:
        per_col = row_tile * (4 * dtype_bytes + 2 * 4)
        d_tile = (budget // max(per_col, 1)) // 128 * 128
    d_tile = max(128, (d_tile // 128) * 128)
    d_tile = min(d_tile, ((d + 127) // 128) * 128)

    grid = (pl.cdiv(rows, row_tile), pl.cdiv(d, d_tile))

    if vmem_limit_bytes is None:
        working_set = row_tile * d_tile * (4 * dtype_bytes + 2 * 4) + 4 * _MIB
        vmem_limit_bytes = int(min(max(working_set, 32 * _MIB), vmem_cap_limit))

    # Pass 1: per-row inverse RMS (reduction over the trailing d grid axis).
    inv_rms = pl.pallas_call(
        functools.partial(_sumsq_kernel, d=d, d_tile=d_tile),
        out_shape=jax.ShapeDtypeStruct((rows, 1), jnp.float32),
        grid_spec=pltpu.PrefetchScalarGridSpec(
            num_scalar_prefetch=0,
            grid=grid,
            in_specs=[pl.BlockSpec((row_tile, d_tile), lambda i, j: (i, j))],
            out_specs=pl.BlockSpec((row_tile, 1), lambda i, j: (i, 0)),
        ),
        compiler_params=pltpu.CompilerParams(
            dimension_semantics=("parallel", "arbitrary"),
            vmem_limit_bytes=vmem_limit_bytes,
        ),
    )(x2)

    # Pass 2: apply x * inv_rms * scale (fully parallel over both grid axes).
    out = pl.pallas_call(
        _apply_kernel,
        out_shape=jax.ShapeDtypeStruct((rows, d), x.dtype),
        grid_spec=pltpu.PrefetchScalarGridSpec(
            num_scalar_prefetch=0,
            grid=grid,
            in_specs=[
                pl.BlockSpec((row_tile, d_tile), lambda i, j: (i, j)),
                pl.BlockSpec((row_tile, 1), lambda i, j: (i, 0)),
                pl.BlockSpec((1, d_tile), lambda i, j: (0, j)),
            ],
            out_specs=pl.BlockSpec((row_tile, d_tile), lambda i, j: (i, j)),
        ),
        compiler_params=pltpu.CompilerParams(
            dimension_semantics=("parallel", "parallel"),
            vmem_limit_bytes=vmem_limit_bytes,
        ),
    )(x2, inv_rms, scale2)
    return out.reshape(*lead_shape, d)


# ----------------------------- reference & demo ------------------------------


def _reference(x, scale, d):
    x32 = x.astype(jnp.float32)
    x_norm = jnp.linalg.norm(x32, ord=2, axis=-1, keepdims=True)
    return (x32 / (x_norm * d ** (-0.5)) * scale.astype(jnp.float32)).astype(x.dtype)


if __name__ == "__main__":
    key = jax.random.PRNGKey(0)

    # 1) Small shape implied by the module: batch of sequences with hidden dim d.
    batch, seq, d = 2, 8, 32
    x = jax.random.normal(key, (batch, seq, d), dtype=jnp.float32)
    scale = jnp.ones((d,), dtype=jnp.float32)  # matches nn.Parameter(torch.ones(d))

    out = jax.block_until_ready(rmsnorm(x, scale))
    ref = _reference(x, scale, d)
    assert out.shape == x.shape
    assert jnp.allclose(out, ref, atol=1e-5, rtol=1e-5), "mismatch vs reference"

    # 2) Row count not a multiple of the sublane pack -> ragged last row block.
    x2 = jax.random.normal(jax.random.PRNGKey(1), (3, 5, d), dtype=jnp.float32)
    out2 = jax.block_until_ready(rmsnorm(x2, scale))
    ref2 = _reference(x2, scale, d)
    assert out2.shape == x2.shape
    assert jnp.allclose(out2, ref2, atol=1e-5, rtol=1e-5), "ragged-row mismatch"

    # 3) Force the d-tiled fallback path (ragged d block + non-trivial scale).
    d3 = 160
    k3a, k3b = jax.random.split(jax.random.PRNGKey(2))
    x3 = jax.random.normal(k3a, (4, 7, d3), dtype=jnp.float32)
    scale3 = jax.random.normal(k3b, (d3,), dtype=jnp.float32)
    out3 = jax.block_until_ready(rmsnorm(x3, scale3, row_tile=16, d_tile=128))
    ref3 = _reference(x3, scale3, d3)
    assert out3.shape == x3.shape
    assert jnp.allclose(out3, ref3, atol=1e-5, rtol=1e-5), "d-tiled path mismatch"

    print("KERNEL_OK")
</pallas_src>

<mosaic_0001>
module attributes {stable_mosaic.version = 11 : i64} {
  func.func @_rmsnorm_kernel(%arg0: i32, %arg1: memref<8x32xf32, #tpu.memory_space<vmem>>, %arg2: memref<1x32xf32, #tpu.memory_space<vmem>>, %arg3: memref<8x32xf32, #tpu.memory_space<vmem>>) attributes {dimension_semantics = [#tpu.dimension_semantics<parallel>], iteration_bounds = array<i64: 2>, scalar_prefetch = 0 : i64, scratch_operands = 0 : i64, tpu.core_type = #tpu.core_type<tc>, window_params = [{transform_indices = @transform_0, window_bounds = array<i64: 8, 32>}, {pipeline_mode = #tpu.pipeline_mode<synchronous>, transform_indices = @transform_1, window_bounds = array<i64: 1, 32>}, {transform_indices = @transform_2, window_bounds = array<i64: 8, 32>}]} {
    %c0 = arith.constant 0 : index
    %c0_0 = arith.constant 0 : index
    %0 = vector.load %arg1[%c0, %c0_0] : memref<8x32xf32, #tpu.memory_space<vmem>>, vector<8x32xf32>
    %c0_1 = arith.constant 0 : index
    %c0_2 = arith.constant 0 : index
    %1 = vector.load %arg2[%c0_1, %c0_2] : memref<1x32xf32, #tpu.memory_space<vmem>>, vector<1x32xf32>
    %2 = arith.mulf %0, %0 : vector<8x32xf32>
    %cst = arith.constant dense<0.000000e+00> : vector<8xf32>
    %3 = vector.multi_reduction <add>, %2, %cst [1] : vector<8x32xf32> to vector<8xf32>
    %4 = vector.shape_cast %3 : vector<8xf32> to vector<8x1xf32>
    %cst_3 = arith.constant 3.125000e-02 : f32
    %5 = vector.broadcast %cst_3 : f32 to vector<8x1xf32>
    %6 = arith.mulf %4, %5 : vector<8x1xf32>
    %7 = math.rsqrt %6 : vector<8x1xf32>
    %8 = vector.broadcast %7 : vector<8x1xf32> to vector<8x32xf32>
    %9 = arith.mulf %0, %8 : vector<8x32xf32>
    %10 = vector.broadcast %1 : vector<1x32xf32> to vector<8x32xf32>
    %11 = arith.mulf %9, %10 : vector<8x32xf32>
    %c0_4 = arith.constant 0 : index
    %c0_5 = arith.constant 0 : index
    %12 = vector.load %arg3[%c0_4, %c0_5] : memref<8x32xf32, #tpu.memory_space<vmem>>, vector<8x32xf32>
    tpu.vector_store %arg3[%c0_4, %c0_5], %11 {strides = array<i32>} : memref<8x32xf32, #tpu.memory_space<vmem>>, vector<8x32xf32>,
    return
  }
  func.func @transform_0(%arg0: i32) -> (i32, i32) {
    %c0_i32 = arith.constant 0 : i32
    %c0_i32_0 = arith.constant 0 : i32
    return %arg0, %c0_i32 : i32, i32
  }
  func.func @transform_1(%arg0: i32) -> (i32, i32) {
    %c0_i32 = arith.constant 0 : i32
    %c0_i32_0 = arith.constant 0 : i32
    %c0_i32_1 = arith.constant 0 : i32
    return %c0_i32, %c0_i32_0 : i32, i32
  }
  func.func @transform_2(%arg0: i32) -> (i32, i32) {
    %c0_i32 = arith.constant 0 : i32
    %c0_i32_0 = arith.constant 0 : i32
    return %arg0, %c0_i32 : i32, i32
  }
}

</mosaic_0001>

<llo_original>
// kernel: tpu_custom_call.1
$region0: #{tpu_custom_call.1}
  #allocation0 [shape = 'u32[]', space=smem, size = 0x4, offset = 0x4, fixed_abs, tag = 'smem constant byte address 0x4 - core index']
  #allocation1 [shape = 'u32[144,128]{1,0:T(1,128)}', space=vmem, size = 0x12000, scoped, tag = 'internal scratch']
  %s0 = inlined_call_operand.hbm [shape: f32[16,32], index: 0, kind: input, shape index: {}]
  %s1 = inlined_call_operand.vmem [shape: f32[1,32], index: 1, kind: input, shape index: {}]
  %s2 = inlined_call_operand.hbm [shape: f32[16,32], index: 2, kind: output, shape index: {}]
  %s3 = sld [smem:[#allocation0]]
  $region45: #{tpu_custom_call.1} parent=0
    _
  %s5 = ssub.s32 1, %s3
  %s6 = scalar_select 0, %s5, %s3
  $region1: #{tpu_custom_call.1} parent=0
    #allocation2 [shape = 'u8[8192]{0}', space=vmem, size = 0x2000, scoped, tag = 'input window, operand 0']
    #allocation3 [shape = 's32[2]{0}', space=sflag, size = 0x8, scoped, tag = 'scoped memory for tpu_custom_call.1']
    #allocation4 [shape = 's32[2]{0}', space=sflag, size = 0x8, scoped, tag = 'scoped memory for tpu_custom_call.1']
    #allocation5 [shape = 'u8[8192]{0}', space=vmem, size = 0x2000, scoped, tag = 'output window, operand 0']
    %7 = vsyncpa [#allocation3], 0
    %s8 = scalar_lea.sflag [#allocation3], 1
    %9 = vsyncpa %s8, 0
    %10 = vsyncpa [#allocation4], 0
    %s11 = scalar_lea.sflag [#allocation4], 1
    %12 = vsyncpa %s11, 0
    loop: start=0, step=1, limit=4
    $region2: #{tpu_custom_call.1} parent=1 // loop_pre_header
      _
    $region3: #{tpu_custom_call.1} parent=1 // loop_header
      %s14 = sphi 0, %s18
      %p15 = scmp.ge.s32.totalorder %s14, 4
      %s24 = sphi 0, %s26
      %s27 = sphi 0, %s24
      %s28 = sphi 0, %s27
      %s44 = sphi 0, %s28
      %s48 = sphi 0, %s48
      %s50 = sphi 0, %s48
      %s51 = sphi 0, %s50
      %s65 = sphi 0, %s51
      %s71 = sphi 0, %s73
      %s74 = sphi 0, %s71
      %s75 = sphi 0, %s74
      %s91 = sphi 0, %s75
    $region4: #{tpu_custom_call.1} parent=1 // loop_header_branch
      %17 = sbr.rel (%p15) target = $region8
    $region5: #{tpu_custom_call.1} parent=1 // loop_body
      %s19 = ssub.s32 %s14, 1
      %s20 = ssub.s32 %s14, 2
      %s21 = sadd.s32 %s14, 1
      %s22 = ssub.s32 %s14, %s21
      %p23 = scmp.eq.s32.totalorder %s22, 0
      %s25 = sadd.s32 %s24, 1
      %s26 = scalar_select %p23, %s24, %s25
      %p29 = pneg %p23
      %p30 = scmp.eq.s32.totalorder %s14, 1
      %p31 = por %p29, %p30
      %p32 = scmp.ne.s32.totalorder %s24, %s27
      %p33 = scmp.eq.s32.totalorder %s14, 0
      %p34 = por %p32, %p33
      %p35 = scmp.ne.s32.totalorder %s24, %s27
      %p36 = scmp.eq.s32.totalorder %s19, 1
      %p37 = por %p35, %p36
      %p38 = scmp.ne.s32.totalorder %s27, %s28
      %p39 = scmp.eq.s32.totalorder %s19, 0
      %p40 = por %p38, %p39
      %p41 = scmp.ne.s32.totalorder %s27, %s28
      %p42 = scmp.eq.s32.totalorder %s20, 1
      %p43 = por %p41, %p42
      %p45 = scmp.ne.s32.totalorder %s28, %s44
      %p46 = scmp.eq.s32.totalorder %s20, 0
      %p47 = por %p45, %p46
      %s49 = sadd.s32 %s48, 1
      %p52 = scmp.eq.s32.totalorder %s14, 1
      %p53 = scmp.ne.s32.totalorder %s48, %s50
      %p54 = scmp.eq.s32.totalorder %s14, 0
      %p55 = por %p53, %p54
      %p56 = scmp.ne.s32.totalorder %s48, %s50
      %p57 = scmp.eq.s32.totalorder %s19, 1
      %p58 = por %p56, %p57
      %p59 = scmp.ne.s32.totalorder %s50, %s51
      %p60 = scmp.eq.s32.totalorder %s19, 0
      %p61 = por %p59, %p60
      %p62 = scmp.ne.s32.totalorder %s50, %s51
      %p63 = scmp.eq.s32.totalorder %s20, 1
      %p64 = por %p62, %p63
      %p66 = scmp.ne.s32.totalorder %s51, %s65
      %p67 = scmp.eq.s32.totalorder %s20, 0
      %p68 = por %p66, %p67
      %s69 = ssub.s32 %s14, %s21
      %p70 = scmp.eq.s32.totalorder %s69, 0
      %s72 = sadd.s32 %s71, 1
      %s73 = scalar_select %p70, %s71, %s72
      %p76 = pneg %p70
      %p77 = scmp.eq.s32.totalorder %s14, 1
      %p78 = por %p76, %p77
      %p79 = scmp.ne.s32.totalorder %s71, %s74
      %p80 = scmp.eq.s32.totalorder %s14, 0
      %p81 = por %p79, %p80
      %p82 = scmp.ne.s32.totalorder %s71, %s74
      %p83 = scmp.eq.s32.totalorder %s19, 1
      %p84 = por %p82, %p83
      %p85 = scmp.ne.s32.totalorder %s74, %s75
      %p86 = scmp.eq.s32.totalorder %s19, 0
      %p87 = por %p85, %p86
      %p88 = scmp.ne.s32.totalorder %s74, %s75
      %p89 = scmp.eq.s32.totalorder %s20, 1
      %p90 = por %p88, %p89
      %p92 = scmp.ne.s32.totalorder %s75, %s91
      %p93 = scmp.eq.s32.totalorder %s20, 0
      %p94 = por %p92, %p93
      %p95 = scmp.le.s32.totalorder 1, %s14
      %p96 = scmp.lt.s32.totalorder %s14, 3
      %p97 = pnand %p95, %p96
      %p98 = pneg %p97
      // Predicated region
      $region9: #{tpu_custom_call.1} parent=5 // pred_check
        _
      $region10: #{tpu_custom_call.1} parent=5 // pred_check_branch
        %100 = sbr.rel (%p97) target = $region12
      $region11: #{tpu_custom_call.1} parent=5 // pred_region
        %s101 = ssub.s32 %s14, 1
        // Predicated region
        $region13: #{tpu_custom_call.1} parent=11 // pred_check
          %p102 = pneg %p61
        $region14: #{tpu_custom_call.1} parent=11 // pred_check_branch
          %104 = sbr.rel (%p102) target = $region16
        $region15: #{tpu_custom_call.1} parent=11 // pred_region
          _
        $region16: #{tpu_custom_call.1} parent=11 // pred_fallthru
          _
      $region12: #{tpu_custom_call.1} parent=5 // pred_fallthru
        _
      %p105 = scmp.lt.s32.totalorder %s14, 2
      // Predicated region
      $region17: #{tpu_custom_call.1} parent=5 // pred_check
        %p106 = pneg %p105
      $region18: #{tpu_custom_call.1} parent=5 // pred_check_branch
        %108 = sbr.rel (%p106) target = $region20
      $region19: #{tpu_custom_call.1} parent=5 // pred_region
        // Predicated region
        $region21: #{tpu_custom_call.1} parent=19 // pred_check
          %p109 = pneg %p34
        $region22: #{tpu_custom_call.1} parent=19 // pred_check_branch
          %111 = sbr.rel (%p109) target = $region24
        $region23: #{tpu_custom_call.1} parent=19 // pred_region
          %s112 = sand.u32 %s24, 1
          %s113 = scalar_lea.sflag [#allocation3], %s112
          %s114 = sand.u32 %s24, 1
          %s115 = smul.addr %s114, 8
          %s116 = scalar_lea.vmem [#allocation2], %s115
          %s118 = ssub.s32 128, 128
          %119 = vsyncadd %s113, %s118
          %s120 = smul.addr %s14, 128
          %s121 = scalar_lea.hbm %s0, %s120
          %s123 = sshll.u32 %s116, 4
          %s124 = int_to_ptr.vmem [resolvable:$true] %s123
          %126 = dma.hbm_to_vmem [thread:$0]  %s121, 128, %s124, %s113
        $region24: #{tpu_custom_call.1} parent=19 // pred_fallthru
          _
      $region20: #{tpu_custom_call.1} parent=5 // pred_fallthru
        _
      %p127 = scmp.le.s32.totalorder 1, %s14
      %p128 = scmp.lt.s32.totalorder %s14, 3
      %p129 = pnand %p127, %p128
      %p130 = pneg %p129
      // Predicated region
      $region25: #{tpu_custom_call.1} parent=5 // pred_check
        _
      $region26: #{tpu_custom_call.1} parent=5 // pred_check_branch
        %132 = sbr.rel (%p129) target = $region28
      $region27: #{tpu_custom_call.1} parent=5 // pred_region
        %s133 = ssub.s32 %s14, 1
        %s134 = sand.u32 %s27, 1
        %s135 = scalar_lea.sflag [#allocation3], %s134
        %s136 = sand.u32 %s27, 1
        %s137 = smul.addr %s136, 8
        %s138 = scalar_lea.vmem [#allocation2], %s137
        // Predicated region
        $region29: #{tpu_custom_call.1} parent=27 // pred_check
          %p139 = pneg %p40
        $region30: #{tpu_custom_call.1} parent=27 // pred_check_branch
          %141 = sbr.rel (%p139) target = $region32
        $region31: #{tpu_custom_call.1} parent=27 // pred_region
          %142 = dma.done %s135, 128
        $region32: #{tpu_custom_call.1} parent=27 // pred_fallthru
          _
        %s143 = sand.u32 %s27, 1
        %s144 = scalar_lea.sflag [#allocation3], %s143
        %s145 = sand.u32 %s27, 1
        %s146 = smul.addr %s145, 8
        %s147 = scalar_lea.vmem [#allocation2], %s146
        %p148 = pneg %p40
        %p149 = pneg %p37
        %p150 = pneg %p61
        %p151 = pneg %p58
        %p152 = pneg %p87
        %p153 = pneg %p84
        %s154 = sand.u32 %s74, 1
        %s155 = scalar_lea.sflag [#allocation4], %s154
        %s156 = sand.u32 %s74, 1
        %s157 = smul.addr %s156, 8
        %s158 = scalar_lea.vmem [#allocation5], %s157
        %v159 = vld [vmem:[%s138] sm:$0xff]
        %v160 = vld [vmem:[%s1] sm:$0x1]
        %v161 = vmul.f32 %v159, %v159
        %vm162 = vcmask 261120
        %v163 = vsel %vm162, %v161, 0.0
        %164 = vadd.xlane.f32.xlu0 %v163
        %v165 = vpop.xlane.xlu0 %164
        %v166 = vmul.f32 %v165, 0.03125
        %v167 = vrsqrt.pop %v166
        %v168 = vmul.f32 %v159, %v167
        %v170 = vlaneseq
        %v171 = vshrl.u32 %v170, 7
        %v172 = vsub.s32 0, %v171
        %v173 = vrot.slane %v160, %v172
        %v175 = vmul.f32 %v168, %v173
        %176 = vst.msk [vmem:[%s158] sm:$0xff] %vm162, %v175
        %s177 = sand.u32 %s74, 1
        %s178 = scalar_lea.sflag [#allocation4], %s177
        %s179 = sand.u32 %s74, 1
        %s180 = smul.addr %s179, 8
        %s181 = scalar_lea.vmem [#allocation5], %s180
        // Predicated region
        $region33: #{tpu_custom_call.1} parent=27 // pred_check
          %p182 = pneg %p84
        $region34: #{tpu_custom_call.1} parent=27 // pred_check_branch
          %184 = sbr.rel (%p182) target = $region36
        $region35: #{tpu_custom_call.1} parent=27 // pred_region
          %s186 = ssub.s32 128, 128
          %187 = vsyncadd %s178, %s186
          %s188 = smul.addr %s19, 128
          %s189 = scalar_lea.hbm %s2, %s188
          %s191 = sshll.u32 %s181, 4
          %s192 = int_to_ptr.vmem [resolvable:$true] %s191
          %194 = dma.vmem_to_hbm [thread:$0]  %s192, 128, %s189, %s178
        $region36: #{tpu_custom_call.1} parent=27 // pred_fallthru
          _
      $region28: #{tpu_custom_call.1} parent=5 // pred_fallthru
        _
      %p195 = scmp.le.s32.totalorder 2, %s14
      // Predicated region
      $region37: #{tpu_custom_call.1} parent=5 // pred_check
        %p196 = pneg %p195
      $region38: #{tpu_custom_call.1} parent=5 // pred_check_branch
        %198 = sbr.rel (%p196) target = $region40
      $region39: #{tpu_custom_call.1} parent=5 // pred_region
        %s199 = ssub.s32 %s14, 2
        // Predicated region
        $region41: #{tpu_custom_call.1} parent=39 // pred_check
          %p200 = pneg %p90
        $region42: #{tpu_custom_call.1} parent=39 // pred_check_branch
          %202 = sbr.rel (%p200) target = $region44
        $region43: #{tpu_custom_call.1} parent=39 // pred_region
          %s203 = sand.u32 %s75, 1
          %s204 = scalar_lea.sflag [#allocation4], %s203
          %s205 = sand.u32 %s75, 1
          %s206 = smul.addr %s205, 8
          %s207 = scalar_lea.vmem [#allocation5], %s206
          %208 = dma.done %s204, 128
        $region44: #{tpu_custom_call.1} parent=39 // pred_fallthru
          _
      $region40: #{tpu_custom_call.1} parent=5 // pred_fallthru
        _
    $region6: #{tpu_custom_call.1} parent=1 // loop_footer
      %s18 = sadd.s32 1, %s14
    $region7: #{tpu_custom_call.1} parent=1 // loop_footer_branch
      %13 = sbr.rel target = $region3
    $region8: #{tpu_custom_call.1} parent=1 // loop_exit
      _
    %209 = vsyncpa [#allocation3], 1
    %s210 = scalar_lea.sflag [#allocation3], 1
    %211 = vsyncpa %s210, 1
    %212 = vsyncpa [#allocation4], 1
    %s213 = scalar_lea.sflag [#allocation4], 1
    %214 = vsyncpa %s213, 1

</llo_original>
